<compile_context>
chip_gen: v7x
topology: tpu7x:2x2x1
jax: 0.10.0
libtpu: 0.0.40
codegen_flags: <defaults>
</compile_context>

<pallas_src>
import jax
import jax.numpy as jnp
from jax.experimental import pallas as pl
from jax.experimental.pallas import tpu as pltpu


def _pick_row_tile(rows, n, n_prefix, max_tile_bytes=2 * 1024 * 1024):
    """tile_rows = n**p: largest power of the digit base whose f32 output tile
    stays within max_tile_bytes.  Power-of-base tiles keep the in-tile prefix
    a pure kron of w with itself (no per-row div/mod or one-hot gathers)."""
    if n_prefix == 0:
        return 1, 0
    cap_rows = max(n, max_tile_bytes // (n * n * 4))
    p = 1
    while p < n_prefix and n ** (p + 1) <= cap_rows:
        p += 1
    tile = n ** p
    # Output block's sublane dim must be a multiple of 8 or the full extent.
    if tile != rows and tile % 8 != 0:
        tile, p = rows, n_prefix  # TODO(synk): pad rows for awkward (non-x8) N instead
    return tile, p


def _symcores_kernel(order, rank, n, p, use_mxu):
    n_prefix = order - 2          # leading index positions folded onto the row axis
    n_high = n_prefix - p         # digits determined solely by the grid index

    def kernel(wt_ref, pair_ref, o_ref):
        g = pl.program_id(0)
        pair = pair_ref[...]                               # (R, N*N) lane-dense

        # Per-tile factor from the high digits (depend only on g): scalar-unit
        # int div/mod + one dynamic-sublane row load per digit.  scale[0, r] =
        # prod_j w[r, digit_j(g)].  (Empty loop for the shipped order-3 config.)
        scale = None
        for j in range(n_high):
            div = n ** (n_high - 1 - j)
            digit = (g // div) % n
            row = wt_ref[pl.ds(digit, 1), :]               # (1, R)
            scale = row if scale is None else scale * row

        # In-tile prefix columns via kron (no XLU reductions, no per-row ints):
        # prefix[t, r] = prod over the p base-N digits of t of w[r, digit].
        if p == 0:
            prefix = scale if scale is not None else jnp.ones((1, rank), jnp.float32)
        else:
            wt = wt_ref[...]                               # (N, R)
            prefix = wt
            for _ in range(p - 1):
                prefix = (wt[:, None, :] * prefix[None, :, :]).reshape(
                    prefix.shape[0] * n, rank)
            if scale is not None:
                prefix = prefix * scale                    # fold per-tile factor in

        # Rank contraction: out_tile = prefix @ pair, (T, R) x (R, N*N).
        if use_mxu:
            acc = jnp.dot(prefix, pair, preferred_element_type=jnp.float32)
        else:
            # Small rank: unrolled VPU broadcast-FMA, init with the r=0 term
            # (no zero-fill + add pass).  Single store of the fused expression.
            acc = prefix[:, 0:1] * pair[0:1, :]
            for r in range(1, rank):
                acc = acc + prefix[:, r:r + 1] * pair[r:r + 1, :]

        o_ref[...] = acc.astype(o_ref.dtype)

    return kernel


def symcores_forward(v, order):
    """v: (rank, N) raw embedding weight (weight_v).  Returns the (N,)*order tensor."""
    rank, n = v.shape
    assert order >= 2, "order==1 is a trivial row-sum; kernel path expects order >= 2"

    # weight_norm with weight_g == 1: per-row unit-L2 normalization.
    # (Zero rows give inf/nan, matching PyTorch weight_norm's divide-by-zero.)
    inv_norm = jax.lax.rsqrt(jnp.sum(v * v, axis=1, keepdims=True))
    w = (v * inv_norm).astype(jnp.float32)                           # (R, N)
    wt = w.T                                                         # (N, R)
    pair = (w[:, :, None] * w[:, None, :]).reshape(rank, n * n)      # (R, N*N)

    n_prefix = order - 2
    rows = n ** n_prefix                    # flattened (i1..i_{K-2}) axis
    tile_rows, p = _pick_row_tile(rows, n, n_prefix)
    use_mxu = rank >= 8                     # MXU rank-contraction pays off ~rank>=8

    out_flat = pl.pallas_call(
        _symcores_kernel(order, rank, n, p, use_mxu),
        out_shape=jax.ShapeDtypeStruct((rows, n * n), jnp.float32),
        grid=(rows // tile_rows,),
        in_specs=[pl.BlockSpec((n, rank), lambda g: (0, 0)),         # tiny, resident
                  pl.BlockSpec((rank, n * n), lambda g: (0, 0))],    # tiny, resident
        out_specs=pl.BlockSpec((tile_rows, n * n), lambda g: (g, 0)),
        compiler_params=pltpu.CompilerParams(
            dimension_semantics=("parallel",)),
    )(wt, pair)
    # Glue: lane-dense flattened slab -> K-D PyTorch output shape.
    return out_flat.reshape((n,) * order)


def symcores_reference(v, order):
    """Pure-JAX reference mirroring the PyTorch loop."""
    w = v / jnp.linalg.norm(v, axis=1, keepdims=True)
    approx = None
    for r in range(v.shape[0]):
        comp = w[r]
        for _ in range(order - 1):
            comp = comp[..., None] * w[r]
        approx = comp if approx is None else approx + comp
    return approx


if __name__ == "__main__":
    # Module config: shape_tuple = (16, 16, 16) -> order=3, N=16 ; rank=2.
    N = 16
    order = 3
    rank = 2

    # Deterministic synthetic parameters (weight_v of the weight-normed Embedding).
    key = jax.random.PRNGKey(0)
    weight_v = jax.random.normal(key, (rank, N), dtype=jnp.float32)
    # weight_g is forced to ones in __init__, so it drops out of the math.

    out = symcores_forward(weight_v, order)
    out = jax.block_until_ready(out)

    ref = symcores_reference(weight_v, order)
    assert out.shape == (N,) * order
    assert jnp.allclose(out, ref, atol=1e-5, rtol=1e-5)

    print("KERNEL_OK")
</pallas_src>

<mosaic_0001>
module attributes {stable_mosaic.version = 11 : i64} {
  func.func @kernel(%arg0: i32, %arg1: memref<16x2xf32, #tpu.memory_space<vmem>>, %arg2: memref<2x256xf32, #tpu.memory_space<vmem>>, %arg3: memref<16x256xf32, #tpu.memory_space<vmem>>) attributes {dimension_semantics = [#tpu.dimension_semantics<parallel>], iteration_bounds = array<i64: 1>, scalar_prefetch = 0 : i64, scratch_operands = 0 : i64, tpu.core_type = #tpu.core_type<tc>, window_params = [{pipeline_mode = #tpu.pipeline_mode<synchronous>, transform_indices = @transform_0, window_bounds = array<i64: 16, 2>}, {pipeline_mode = #tpu.pipeline_mode<synchronous>, transform_indices = @transform_1, window_bounds = array<i64: 2, 256>}, {transform_indices = @transform_2, window_bounds = array<i64: 16, 256>}]} {
    %c0 = arith.constant 0 : index
    %c0_0 = arith.constant 0 : index
    %0 = vector.load %arg2[%c0, %c0_0] : memref<2x256xf32, #tpu.memory_space<vmem>>, vector<2x256xf32>
    %c0_1 = arith.constant 0 : index
    %c0_2 = arith.constant 0 : index
    %1 = vector.load %arg1[%c0_1, %c0_2] : memref<16x2xf32, #tpu.memory_space<vmem>>, vector<16x2xf32>
    %2 = vector.extract_strided_slice %1 {offsets = [0, 0], sizes = [16, 1], strides = [1, 1]} : vector<16x2xf32> to vector<16x1xf32>
    %3 = vector.extract_strided_slice %0 {offsets = [0, 0], sizes = [1, 256], strides = [1, 1]} : vector<2x256xf32> to vector<1x256xf32>
    %4 = vector.broadcast %2 : vector<16x1xf32> to vector<16x256xf32>
    %5 = vector.broadcast %3 : vector<1x256xf32> to vector<16x256xf32>
    %6 = arith.mulf %4, %5 : vector<16x256xf32>
    %7 = vector.extract_strided_slice %1 {offsets = [0, 1], sizes = [16, 1], strides = [1, 1]} : vector<16x2xf32> to vector<16x1xf32>
    %8 = vector.extract_strided_slice %0 {offsets = [1, 0], sizes = [1, 256], strides = [1, 1]} : vector<2x256xf32> to vector<1x256xf32>
    %9 = vector.broadcast %7 : vector<16x1xf32> to vector<16x256xf32>
    %10 = vector.broadcast %8 : vector<1x256xf32> to vector<16x256xf32>
    %11 = arith.mulf %9, %10 : vector<16x256xf32>
    %12 = arith.addf %6, %11 : vector<16x256xf32>
    %c0_3 = arith.constant 0 : index
    %c0_4 = arith.constant 0 : index
    %13 = vector.load %arg3[%c0_3, %c0_4] : memref<16x256xf32, #tpu.memory_space<vmem>>, vector<16x256xf32>
    tpu.vector_store %arg3[%c0_3, %c0_4], %12 {strides = array<i32>} : memref<16x256xf32, #tpu.memory_space<vmem>>, vector<16x256xf32>,
    return
  }
  func.func @transform_0(%arg0: i32) -> (i32, i32) {
    %c0_i32 = arith.constant 0 : i32
    %c0_i32_0 = arith.constant 0 : i32
    %c0_i32_1 = arith.constant 0 : i32
    return %c0_i32, %c0_i32_0 : i32, i32
  }
  func.func @transform_1(%arg0: i32) -> (i32, i32) {
    %c0_i32 = arith.constant 0 : i32
    %c0_i32_0 = arith.constant 0 : i32
    %c0_i32_1 = arith.constant 0 : i32
    return %c0_i32, %c0_i32_0 : i32, i32
  }
  func.func @transform_2(%arg0: i32) -> (i32, i32) {
    %c0_i32 = arith.constant 0 : i32
    %c0_i32_0 = arith.constant 0 : i32
    return %arg0, %c0_i32 : i32, i32
  }
}

</mosaic_0001>

<llo_original>
// kernel: tpu_custom_call.1
$region0: #{tpu_custom_call.1}
  #allocation0 [shape = 'u32[]', space=smem, size = 0x4, offset = 0x4, fixed_abs, tag = 'smem constant byte address 0x4 - core index']
  #allocation1 [shape = 'u32[144,128]{1,0:T(1,128)}', space=vmem, size = 0x12000, scoped, tag = 'internal scratch']
  %s0 = inlined_call_operand.vmem [shape: f32[16,2], index: 0, kind: input, shape index: {}]
  %s1 = inlined_call_operand.vmem [shape: f32[2,256], index: 1, kind: input, shape index: {}]
  %s2 = inlined_call_operand.hbm [shape: f32[16,256], index: 2, kind: output, shape index: {}]
  %s3 = sld [smem:[#allocation0]]
  $region18: #{tpu_custom_call.1} parent=0
    _
  %s5 = ssub.s32 1, %s3
  %s6 = scalar_select 0, %s5, %s3
  $region1: #{tpu_custom_call.1} parent=0
    #allocation2 [shape = 'u8[16384]{0}', space=vmem, size = 0x4000, scoped, tag = 'output window, operand 0, single buffered']
    #allocation3 [shape = 's32[1]{0}', space=sflag, size = 0x4, scoped, tag = 'scoped memory for tpu_custom_call.1']
    %7 = vsyncpa [#allocation3], 0
    // Predicated region
    $region2: #{tpu_custom_call.1} parent=1 // pred_check
      _
    $region3: #{tpu_custom_call.1} parent=1 // pred_check_branch
      %9 = sbr.rel (0) target = $region5
    $region4: #{tpu_custom_call.1} parent=1 // pred_region
      _
    $region5: #{tpu_custom_call.1} parent=1 // pred_fallthru
      _
    // Predicated region
    $region6: #{tpu_custom_call.1} parent=1 // pred_check
      _
    $region7: #{tpu_custom_call.1} parent=1 // pred_check_branch
      %11 = sbr.rel (0) target = $region9
    $region8: #{tpu_custom_call.1} parent=1 // pred_region
      _
    $region9: #{tpu_custom_call.1} parent=1 // pred_fallthru
      _
    %v12 = vld [vmem:[%s1] sm:$0xf]
    %v13 = vld [vmem:[%s0] sm:$0xff]
    %v14 = vld [vmem:[%s0 + $0x8] sm:$0xff]
    %16 = vset.pattern.permute.xlu0 0
    %17 = vperm.xlu0 %16, %v13
    %v18 = vpop.permute.xlu0 %17
    %21 = vset.pattern.permute.xlu0 0
    %22 = vperm.xlu0 %21, %v14
    %v23 = vpop.permute.xlu0 %22
    %v26 = vlaneseq
    %v27 = vshrl.u32 %v26, 7
    %v28 = vsub.s32 0, %v27
    %v29 = vrot.slane %v12, %v28
    %v30 = vlaneseq
    %v31 = vshrl.u32 %v30, 7
    %v32 = vsub.s32 2, %v31
    %v33 = vrot.slane %v12, %v32
    %v36 = vlaneseq
    %v37 = vshrl.u32 %v36, 7
    %v38 = vsub.s32 0, %v37
    %v39 = vrot.slane %v29, %v38
    %v40 = vlaneseq
    %v41 = vshrl.u32 %v40, 7
    %v42 = vsub.s32 0, %v41
    %v43 = vrot.slane %v33, %v42
    %v44 = vmul.f32 %v18, %v39
    %v45 = vmul.f32 %v18, %v43
    %v46 = vmul.f32 %v23, %v39
    %v47 = vmul.f32 %v23, %v43
    %48 = vset.pattern.permute.xlu0 1
    %49 = vperm.xlu0 %48, %v13
    %v50 = vpop.permute.xlu0 %49
    %52 = vset.pattern.permute.xlu0 1
    %53 = vperm.xlu0 %52, %v14
    %v54 = vpop.permute.xlu0 %53
    %v56 = vlaneseq
    %v57 = vshrl.u32 %v56, 7
    %v58 = vsub.s32 1, %v57
    %v59 = vrot.slane %v12, %v58
    %v60 = vlaneseq
    %v61 = vshrl.u32 %v60, 7
    %v62 = vsub.s32 3, %v61
    %v63 = vrot.slane %v12, %v62
    %v66 = vlaneseq
    %v67 = vshrl.u32 %v66, 7
    %v68 = vsub.s32 1, %v67
    %v69 = vrot.slane %v59, %v68
    %v70 = vlaneseq
    %v71 = vshrl.u32 %v70, 7
    %v72 = vsub.s32 1, %v71
    %v73 = vrot.slane %v63, %v72
    %v74 = vmul.f32 %v50, %v69
    %v75 = vmul.f32 %v50, %v73
    %v76 = vmul.f32 %v54, %v69
    %v77 = vmul.f32 %v54, %v73
    %v78 = vadd.f32 %v44, %v74
    %v79 = vadd.f32 %v45, %v75
    %v80 = vadd.f32 %v46, %v76
    %v81 = vadd.f32 %v47, %v77
    %82 = vst [vmem:[#allocation2] sm:$0xff] %v78
    %83 = vst [vmem:[#allocation2 + $0x8] sm:$0xff] %v79
    %84 = vst [vmem:[#allocation2 + $0x10] sm:$0xff] %v80
    %85 = vst [vmem:[#allocation2 + $0x18] sm:$0xff] %v81
    // Predicated region
    $region10: #{tpu_custom_call.1} parent=1 // pred_check
      _
    $region11: #{tpu_custom_call.1} parent=1 // pred_check_branch
      %87 = sbr.rel (0) target = $region13
    $region12: #{tpu_custom_call.1} parent=1 // pred_region
      %s89 = ssub.s32 512, 512
      %90 = vsyncadd [#allocation3], %s89
      %s91 = sshll.u32 [#allocation2], 4
      %s92 = int_to_ptr.vmem [resolvable:$true] %s91
      %97 = dma.vmem_to_hbm [thread:$0]  %s92, 512, %s2, [#allocation3], 256, 256, 16
    $region13: #{tpu_custom_call.1} parent=1 // pred_fallthru
      _
    // Predicated region
    $region14: #{tpu_custom_call.1} parent=1 // pred_check
      _
    $region15: #{tpu_custom_call.1} parent=1 // pred_check_branch
      %99 = sbr.rel (0) target = $region17
    $region16: #{tpu_custom_call.1} parent=1 // pred_region
      %100 = dma.done [#allocation3], 512
    $region17: #{tpu_custom_call.1} parent=1 // pred_fallthru
      _
    %101 = vsyncpa [#allocation3], 1

</llo_original>
